<compile_context>
chip_gen: v7x
topology: tpu7x:2x2x1
jax: 0.10.0
libtpu: 0.0.40
codegen_flags: <defaults>
</compile_context>

<pallas_src>
import functools

import jax
import jax.numpy as jnp
from jax.experimental import pallas as pl
from jax.experimental.pallas import tpu as pltpu


def _round_up(x, m):
    return ((x + m - 1) // m) * m


def ray_forward_kernel(ma_ref, x_ref, w_ref, b_ref, out_ref, *, last,
                       tanh_in_bf16):
    x = x_ref[...]
    w = w_ref[...]
    if x.dtype != w.dtype:
        # bf16 weights: cast the activation tile on the VPU here, never as an
        # extra HBM pass in the wrapper.
        x = x.astype(w.dtype)
    y = jnp.dot(x, w, preferred_element_type=jnp.float32)   # MXU, f32 acc
    y = y + b_ref[...]                                       # VPU
    if last:
        if tanh_in_bf16:
            # ~2x EUP throughput on v6e/v7x; do NOT enable on v5e (no bf16 EUP).
            y = jnp.tanh(y.astype(jnp.bfloat16)).astype(jnp.float32)
        else:
            y = jnp.tanh(y)                                  # EUP
        y = ma_ref[0] * y                                    # VPU scalar scale
    out_ref[...] = y.astype(out_ref.dtype)


def prepare_linear_params(w, b, *, use_bf16=False, pad_n=True):
    """One-time parameter prep (run at module setup, NOT per forward).

    w: (N, K)  -- PyTorch nn.Linear weight layout.
    b: (N,)
    Returns (w_prepped (K, Np), b_prepped (1, Np) float32, N).
    """
    w = jnp.asarray(w)
    b = jnp.asarray(b)
    N, K = w.shape
    Np = _round_up(N, 128) if pad_n else N
    w_t = w.T                                      # (K, N)
    if Np != N:
        # Zero-padded output columns contribute nothing; they only make the
        # stores lane-dense (full-width vst instead of masked partial stores).
        w_t = jnp.pad(w_t, ((0, 0), (0, Np - N)))
        b = jnp.pad(b, (0, Np - N))
    if use_bf16:
        w_t = w_t.astype(jnp.bfloat16)
    b = b.astype(jnp.float32).reshape(1, Np)
    return w_t, b, N


def ray_module_forward(x, w_p, b_p, n_out, *, max_action=1.0, last=True,
                       tm=512, tanh_in_bf16=False, unpad=True):
    """Pallas implementation of RayModule.forward with a Linear forward_layer.

    x:     (M, K)   activations (float32, or bfloat16 if upstream emits bf16)
    w_p:   (K, Np)  prepared weight from prepare_linear_params
    b_p:   (1, Np)  prepared bias
    n_out: true output width N (Np may be lane-padded to a multiple of 128)
    """
    M, K = x.shape
    Kw, Np = w_p.shape
    assert K == Kw, (K, Kw)
    out_dtype = x.dtype

    # Batch tiling.  Large tiles amortize the ~0.35 us per grid step; for
    # medium batches pick the tile so the grid has >= 2 steps (both v7x
    # TensorCores get work through the "parallel" axis); tiny batches collapse
    # to a single step where per-step overhead would dominate.
    sub = 16 if (x.dtype == jnp.bfloat16 or w_p.dtype == jnp.bfloat16) else 8
    if M <= 64:
        tm_eff = _round_up(max(M, 1), sub)
    elif M <= tm:
        tm_eff = min(_round_up(pl.cdiv(M, 2), sub), tm)
    else:
        tm_eff = tm
    grid_m = pl.cdiv(M, tm_eff)

    cost = pl.CostEstimate(
        flops=2 * M * K * Np,
        transcendentals=M * Np if last else 0,
        bytes_accessed=(M * K * x.dtype.itemsize
                        + K * Np * w_p.dtype.itemsize
                        + Np * 4
                        + M * Np * jnp.dtype(out_dtype).itemsize),
    )

    kernel = functools.partial(ray_forward_kernel, last=last,
                               tanh_in_bf16=tanh_in_bf16)

    ma = jnp.asarray([max_action], dtype=jnp.float32)

    out = pl.pallas_call(
        kernel,
        out_shape=jax.ShapeDtypeStruct((M, Np), out_dtype),
        grid_spec=pltpu.PrefetchScalarGridSpec(
            num_scalar_prefetch=1,                 # max_action lives in SMEM
            grid=(grid_m,),
            in_specs=[
                # Activations: batch-tiled, K left unpadded (block last dim ==
                # full array dim is legal; the MXU handles K < 128 internally).
                pl.BlockSpec((tm_eff, K), lambda i, _: (i, 0)),
                # Weight: fully VMEM-resident (constant index_map).
                pl.BlockSpec((K, Np), lambda i, _: (0, 0)),
                # Bias.
                pl.BlockSpec((1, Np), lambda i, _: (0, 0)),
            ],
            out_specs=pl.BlockSpec((tm_eff, Np), lambda i, _: (i, 0)),
        ),
        compiler_params=pltpu.CompilerParams(
            dimension_semantics=("parallel",),
        ),
        cost_estimate=cost,
    )(ma, x, w_p, b_p)

    if unpad and Np != n_out:
        # Extra HBM pass over the output; pass unpad=False when the consumer
        # tolerates the lane-padded (M, Np) slab.
        out = out[:, :n_out]
    return out


if __name__ == "__main__":
    # Small actor-head shapes: batch=16, hidden=32, action_dim=16.
    M, K, N = 16, 32, 16
    max_action = 2.0

    key = jax.random.PRNGKey(0)
    kx, kw, kb = jax.random.split(key, 3)

    x = jax.random.normal(kx, (M, K), dtype=jnp.float32)
    # "nn.Linear(K, N)" parameters in PyTorch layout (N, K).
    w = jax.random.normal(kw, (N, K), dtype=jnp.float32) * (1.0 / jnp.sqrt(K))
    b = jax.random.normal(kb, (N,), dtype=jnp.float32) * 0.01

    # One-time parameter prep (transpose, lane-dense N pad, optional bf16).
    w_p, b_p, n_out = prepare_linear_params(w, b)

    # last=True path: max_action * tanh(Linear(x))
    out_last = ray_module_forward(x, w_p, b_p, n_out, max_action=max_action,
                                  last=True)
    out_last = jax.block_until_ready(out_last)

    # last=False path: plain Linear(x)
    out_plain = ray_module_forward(x, w_p, b_p, n_out, max_action=max_action,
                                   last=False)
    out_plain = jax.block_until_ready(out_plain)

    # A different max_action reuses the same compiled kernel (SMEM scalar).
    out_last2 = ray_module_forward(x, w_p, b_p, n_out, max_action=0.5,
                                   last=True)
    out_last2 = jax.block_until_ready(out_last2)

    # Padded (lane-dense) output path: skips the final N slice entirely.
    out_padded = ray_module_forward(x, w_p, b_p, n_out, max_action=max_action,
                                    last=True, unpad=False)
    out_padded = jax.block_until_ready(out_padded)

    # Reference check against plain JAX.
    ref_lin = x @ w.T + b[None, :]
    ref_last = max_action * jnp.tanh(ref_lin)
    assert jnp.allclose(out_plain, ref_lin, atol=1e-5, rtol=1e-5)
    assert jnp.allclose(out_last, ref_last, atol=1e-5, rtol=1e-5)
    assert jnp.allclose(out_last2, 0.5 * jnp.tanh(ref_lin), atol=1e-5, rtol=1e-5)
    assert out_padded.shape == (M, 128)
    assert jnp.allclose(out_padded[:, :N], ref_last, atol=1e-5, rtol=1e-5)

    # TODO(synk): RayModule's weight get/set, get_leaf/get_node, set_eval/train
    # and Ray distributed plumbing are host-side bookkeeping with no kernel
    # equivalent.
    print("KERNEL_OK")
</pallas_src>

<mosaic_0001>
module attributes {stable_mosaic.version = 11 : i64} {
  func.func @ray_forward_kernel(%arg0: i32, %arg1: memref<1xf32, #tpu.memory_space<smem>>, %arg2: memref<16x32xf32, #tpu.memory_space<vmem>>, %arg3: memref<32x128xf32, #tpu.memory_space<vmem>>, %arg4: memref<1x128xf32, #tpu.memory_space<vmem>>, %arg5: memref<16x128xf32, #tpu.memory_space<vmem>>) attributes {dimension_semantics = [#tpu.dimension_semantics<parallel>], iteration_bounds = array<i64: 1>, scalar_prefetch = 1 : i64, scratch_operands = 0 : i64, tpu.core_type = #tpu.core_type<tc>, window_params = [{transform_indices = @transform_0, window_bounds = array<i64: 16, 32>}, {pipeline_mode = #tpu.pipeline_mode<synchronous>, transform_indices = @transform_1, window_bounds = array<i64: 32, 128>}, {pipeline_mode = #tpu.pipeline_mode<synchronous>, transform_indices = @transform_2, window_bounds = array<i64: 1, 128>}, {transform_indices = @transform_3, window_bounds = array<i64: 16, 128>}]} {
    %c0 = arith.constant 0 : index
    %c0_0 = arith.constant 0 : index
    %0 = vector.load %arg2[%c0, %c0_0] : memref<16x32xf32, #tpu.memory_space<vmem>>, vector<16x32xf32>
    %c0_1 = arith.constant 0 : index
    %c0_2 = arith.constant 0 : index
    %1 = vector.load %arg3[%c0_1, %c0_2] : memref<32x128xf32, #tpu.memory_space<vmem>>, vector<32x128xf32>
    %cst = arith.constant dense<0.000000e+00> : vector<16x128xf32>
    %2 = tpu.matmul %0, %1, %cst {dimension_numbers = #tpu.dot_dimension_numbers<[1], [0], [0], [1], [0, 0, 1, 1], [], []>} : vector<16x32xf32>, vector<32x128xf32>, vector<16x128xf32> -> vector<16x128xf32>
    %c0_3 = arith.constant 0 : index
    %c0_4 = arith.constant 0 : index
    %3 = vector.load %arg4[%c0_3, %c0_4] : memref<1x128xf32, #tpu.memory_space<vmem>>, vector<1x128xf32>
    %4 = vector.broadcast %3 : vector<1x128xf32> to vector<16x128xf32>
    %5 = arith.addf %2, %4 : vector<16x128xf32>
    %6 = math.tanh %5 : vector<16x128xf32>
    %c0_5 = arith.constant 0 : index
    %7 = memref.load %arg1[%c0_5] : memref<1xf32, #tpu.memory_space<smem>>
    %8 = vector.broadcast %7 : f32 to vector<16x128xf32>
    %9 = arith.mulf %8, %6 : vector<16x128xf32>
    %c0_6 = arith.constant 0 : index
    %c0_7 = arith.constant 0 : index
    %10 = vector.load %arg5[%c0_6, %c0_7] : memref<16x128xf32, #tpu.memory_space<vmem>>, vector<16x128xf32>
    tpu.vector_store %arg5[%c0_6, %c0_7], %9 {strides = array<i32>} : memref<16x128xf32, #tpu.memory_space<vmem>>, vector<16x128xf32>,
    return
  }
  func.func @transform_0(%arg0: i32, %arg1: memref<1xf32, #tpu.memory_space<smem>>) -> (i32, i32) {
    %c0_i32 = arith.constant 0 : i32
    %c0_i32_0 = arith.constant 0 : i32
    return %arg0, %c0_i32 : i32, i32
  }
  func.func @transform_1(%arg0: i32, %arg1: memref<1xf32, #tpu.memory_space<smem>>) -> (i32, i32) {
    %c0_i32 = arith.constant 0 : i32
    %c0_i32_0 = arith.constant 0 : i32
    %c0_i32_1 = arith.constant 0 : i32
    return %c0_i32, %c0_i32_0 : i32, i32
  }
  func.func @transform_2(%arg0: i32, %arg1: memref<1xf32, #tpu.memory_space<smem>>) -> (i32, i32) {
    %c0_i32 = arith.constant 0 : i32
    %c0_i32_0 = arith.constant 0 : i32
    %c0_i32_1 = arith.constant 0 : i32
    return %c0_i32, %c0_i32_0 : i32, i32
  }
  func.func @transform_3(%arg0: i32, %arg1: memref<1xf32, #tpu.memory_space<smem>>) -> (i32, i32) {
    %c0_i32 = arith.constant 0 : i32
    %c0_i32_0 = arith.constant 0 : i32
    return %arg0, %c0_i32 : i32, i32
  }
}

</mosaic_0001>

<llo_original>
// kernel: tpu_custom_call.1
$region0: #{tpu_custom_call.1}
  #allocation0 [shape = 'u32[]', space=smem, size = 0x4, offset = 0x4, fixed_abs, tag = 'smem constant byte address 0x4 - core index']
  #allocation1 [shape = 'u32[144,128]{1,0:T(1,128)}', space=vmem, size = 0x12000, scoped, tag = 'internal scratch']
  #allocation2 [shape = 's32[1]{0}', space=sflag, size = 0x4, scoped, tag = 'scoped memory for tpu_custom_call.1']
  #allocation3 [shape = 'f32[1]{0:T(128)S(6)}', space=smem, size = 0x200, scoped, tag = 'prefetched SMEM operand 0']
  %s0 = inlined_call_operand.<no memory space> [shape: f32[1], index: 0, kind: input, shape index: {}]
  %s1 = inlined_call_operand.hbm [shape: f32[16,32], index: 1, kind: input, shape index: {}]
  %s2 = inlined_call_operand.hbm [shape: f32[32,128], index: 2, kind: input, shape index: {}]
  %s3 = inlined_call_operand.vmem [shape: f32[1,128], index: 3, kind: input, shape index: {}]
  %s4 = inlined_call_operand.hbm [shape: f32[16,128], index: 4, kind: output, shape index: {}]
  %s5 = sld [smem:[#allocation0]]
  $region30: #{tpu_custom_call.1} parent=0
    _
  %s7 = ssub.s32 1, %s5
  %s8 = scalar_select 0, %s7, %s5
  %9 = sst [smem:[#allocation3]] %s0
  $region1: #{tpu_custom_call.1} parent=0
    #allocation4 [shape = 'u8[8192]{0}', space=vmem, size = 0x2000, scoped, tag = 'input window, operand 1, single buffered']
    #allocation5 [shape = 's32[1]{0}', space=sflag, size = 0x4, scoped, tag = 'scoped memory for tpu_custom_call.1']
    #allocation6 [shape = 's32[1]{0}', space=sflag, size = 0x4, scoped, tag = 'scoped memory for tpu_custom_call.1']
    #allocation7 [shape = 'u8[16384]{0}', space=vmem, size = 0x4000, scoped, tag = 'input window, operand 2, single buffered']
    #allocation8 [shape = 's32[1]{0}', space=sflag, size = 0x4, scoped, tag = 'scoped memory for tpu_custom_call.1']
    #allocation9 [shape = 'u8[8192]{0}', space=vmem, size = 0x2000, scoped, tag = 'output window, operand 0, single buffered']
    %10 = vsyncpa [#allocation5], 0
    %11 = vsyncpa [#allocation8], 0
    %12 = vsyncpa [#allocation6], 0
    // Predicated region
    $region2: #{tpu_custom_call.1} parent=1 // pred_check
      _
    $region3: #{tpu_custom_call.1} parent=1 // pred_check_branch
      %14 = sbr.rel (0) target = $region5
    $region4: #{tpu_custom_call.1} parent=1 // pred_region
      %s16 = ssub.s32 256, 256
      %17 = vsyncadd [#allocation5], %s16
      %s18 = sshll.u32 [#allocation4], 4
      %s19 = int_to_ptr.vmem [resolvable:$true] %s18
      %24 = dma.hbm_to_vmem [thread:$0]  %s1, 256, %s19, [#allocation5], 128, 128, 8
    $region5: #{tpu_custom_call.1} parent=1 // pred_fallthru
      _
    // Predicated region
    $region6: #{tpu_custom_call.1} parent=1 // pred_check
      _
    $region7: #{tpu_custom_call.1} parent=1 // pred_check_branch
      %26 = sbr.rel (0) target = $region9
    $region8: #{tpu_custom_call.1} parent=1 // pred_region
      %s28 = ssub.s32 512, 512
      %29 = vsyncadd [#allocation8], %s28
      %s30 = sshll.u32 [#allocation7], 4
      %s31 = int_to_ptr.vmem [resolvable:$true] %s30
      %36 = dma.hbm_to_vmem [thread:$0]  %s2, 512, %s31, [#allocation8], 128, 128, 8
    $region9: #{tpu_custom_call.1} parent=1 // pred_fallthru
      _
    // Predicated region
    $region10: #{tpu_custom_call.1} parent=1 // pred_check
      _
    $region11: #{tpu_custom_call.1} parent=1 // pred_check_branch
      %38 = sbr.rel (0) target = $region13
    $region12: #{tpu_custom_call.1} parent=1 // pred_region
      _
    $region13: #{tpu_custom_call.1} parent=1 // pred_fallthru
      _
    // Predicated region
    $region14: #{tpu_custom_call.1} parent=1 // pred_check
      _
    $region15: #{tpu_custom_call.1} parent=1 // pred_check_branch
      %40 = sbr.rel (0) target = $region17
    $region16: #{tpu_custom_call.1} parent=1 // pred_region
      %41 = dma.done [#allocation5], 256
    $region17: #{tpu_custom_call.1} parent=1 // pred_fallthru
      _
    // Predicated region
    $region18: #{tpu_custom_call.1} parent=1 // pred_check
      _
    $region19: #{tpu_custom_call.1} parent=1 // pred_check_branch
      %43 = sbr.rel (0) target = $region21
    $region20: #{tpu_custom_call.1} parent=1 // pred_region
      %44 = dma.done [#allocation8], 512
    $region21: #{tpu_custom_call.1} parent=1 // pred_fallthru
      _
    %v45 = vld [vmem:[#allocation4] sm:$0xff]
    %v46 = vld [vmem:[#allocation4 + $0x8] sm:$0xff]
    %v47 = vld [vmem:[#allocation7] sm:$0xff]
    %v48 = vld [vmem:[#allocation7 + $0x8] sm:$0xff]
    %v49 = vld [vmem:[#allocation7 + $0x10] sm:$0xff]
    %v50 = vld [vmem:[#allocation7 + $0x18] sm:$0xff]
    %v51 = vld [vmem:[%s3] sm:$0x1]
    %v53 = vlaneseq
    %v54 = vshrl.u32 %v53, 7
    %v55 = vsub.s32 0, %v54
    %v56 = vrot.slane %v51, %v55
    %vm58 = vcmask 261120
    %v60 = vsel %vm58, %v45, 0
    %v63 = vsel %vm58, %v46, 0
    %65 = vmatprep.subr.mxu0 0.0
    %66 = vmatpush1.msra.mxu0 %v47
    %67 = vmatprep.subr.mxu0 0.0
    %68 = vmatpush1.msra.mxu0 %v48
    %69 = vmatprep.subr.mxu0 0.0
    %70 = vmatpush1.msra.mxu0 %v49
    %71 = vmatprep.subr.mxu0 0.0
    %72 = vmatpush1.msra.mxu0 %v50
    %73 = vmatprep.subr.mxu0 0.0
    %74 = vmatpush1.msra.mxu0 0.0
    %75 = vmatprep.subr.mxu0 0.0
    %76 = vmatpush1.msra.mxu0 0.0
    %77 = vmatprep.subr.mxu0 0.0
    %78 = vmatpush1.msra.mxu0 0.0
    %79 = vmatprep.subr.mxu0 0.0
    %80 = vmatpush1.msra.mxu0 0.0
    %81 = vmatprep.subr.mxu0 0.0
    %82 = vmatpush1.msra.mxu0 0.0
    %83 = vmatprep.subr.mxu0 0.0
    %84 = vmatpush1.msra.mxu0 0.0
    %85 = vmatprep.subr.mxu0 0.0
    %86 = vmatpush1.msra.mxu0 0.0
    %87 = vmatprep.subr.mxu0 0.0
    %88 = vmatpush1.msra.mxu0 0.0
    %89 = vmatprep.subr.mxu0 0.0
    %90 = vmatpush1.msra.mxu0 0.0
    %91 = vmatprep.subr.mxu0 0.0
    %92 = vmatpush1.msra.mxu0 0.0
    %93 = vmatprep.subr.mxu0 0.0
    %94 = vmatpush1.msra.mxu0 0.0
    %95 = vmatprep.subr.mxu0 0.0
    %96 = vmatpush1.msra.mxu0 0.0
    %97 = vmatprep.subr.mxu0 0.0
    %98 = vmatpush1.msra.mxu0 0.0
    %99 = vmatprep.subr.mxu0 0.0
    %100 = vmatpush1.msra.mxu0 0.0
    %101 = vmatprep.subr.mxu0 0.0
    %102 = vmatpush1.msra.mxu0 0.0
    %103 = vmatprep.subr.mxu0 0.0
    %104 = vmatpush1.msra.mxu0 0.0
    %105 = vmatprep.subr.mxu0 0.0
    %106 = vmatpush1.msra.mxu0 0.0
    %107 = vmatprep.subr.mxu0 0.0
    %108 = vmatpush1.msra.mxu0 0.0
    %109 = vmatprep.subr.mxu0 0.0
    %110 = vmatpush1.msra.mxu0 0.0
    %111 = vmatprep.subr.mxu0 0.0
    %112 = vmatpush1.msra.mxu0 0.0
    %113 = vmatprep.subr.mxu0 0.0
    %114 = vmatpush1.msra.mxu0 0.0
    %115 = vmatprep.subr.mxu0 0.0
    %116 = vmatpush1.msra.mxu0 0.0
    %117 = vmatprep.subr.mxu0 0.0
    %118 = vmatpush1.msra.mxu0 0.0
    %119 = vmatprep.subr.mxu0 0.0
    %120 = vmatpush1.msra.mxu0 0.0
    %121 = vmatprep.subr.mxu0 0.0
    %122 = vmatpush1.msra.mxu0 0.0
    %123 = vmatprep.subr.mxu0 0.0
    %124 = vmatpush1.msra.mxu0 0.0
    %125 = vmatprep.subr.mxu0 0.0
    %126 = vmatpush1.msra.mxu0 0.0
    %127 = vmatprep.subr.mxu0 0.0
    %128 = vmatpush1.msra.mxu0 0.0
    %129 = vmatprep.mubr.f32.mxu0 0.0
    %130 = vmatmul.mubr.f32.gmra.mrb[0].mxu0 %v60
    %v131 = vpop.f32.mrb[0].mxu0
    %v132 = vadd.f32 %v56, %v131
    %v133 = vpop.f32.mrb[0].mxu0
    %134 = vmatprep.mubr.f32.mxu0 0.0
    %135 = vmatmul.mubr.f32.gmra.mrb[0].mxu0 %v63
    %v136 = vpop.f32.mrb[0].mxu0
    %v137 = vadd.f32 %v56, %v136
    %v138 = vpop.f32.mrb[0].mxu0
    %139 = vdwg.mxu0
    %v140 = vtanh.pop %v132
    %v141 = vtanh.pop %v137
    %s142 = sld [smem:[#allocation3]]
    %v143 = vstv %s142
    %v144 = vmul.f32 %v143, %v140
    %v145 = vmul.f32 %v143, %v141
    %146 = vst [vmem:[#allocation9] sm:$0xff] %v144
    %147 = vst [vmem:[#allocation9 + $0x8] sm:$0xff] %v145
    // Predicated region
    $region22: #{tpu_custom_call.1} parent=1 // pred_check
      _
    $region23: #{tpu_custom_call.1} parent=1 // pred_check_branch
      %149 = sbr.rel (0) target = $region25
    $region24: #{tpu_custom_call.1} parent=1 // pred_region
      %s151 = ssub.s32 256, 256
      %152 = vsyncadd [#allocation6], %s151
      %s153 = sshll.u32 [#allocation9], 4
      %s154 = int_to_ptr.vmem [resolvable:$true] %s153
      %159 = dma.vmem_to_hbm [thread:$0]  %s154, 256, %s4, [#allocation6], 128, 128, 8
    $region25: #{tpu_custom_call.1} parent=1 // pred_fallthru
      _
    // Predicated region
    $region26: #{tpu_custom_call.1} parent=1 // pred_check
      _
    $region27: #{tpu_custom_call.1} parent=1 // pred_check_branch
      %161 = sbr.rel (0) target = $region29
    $region28: #{tpu_custom_call.1} parent=1 // pred_region
      %162 = dma.done [#allocation6], 256
    $region29: #{tpu_custom_call.1} parent=1 // pred_fallthru
      _
    %163 = vsyncpa [#allocation5], 1
    %164 = vsyncpa [#allocation8], 1
    %165 = vsyncpa [#allocation6], 1

</llo_original>
